<compile_context>
chip_gen: v6e
topology: v6e:2x2x1
jax: 0.10.0
libtpu: 0.0.40
codegen_flags: <defaults>
</compile_context>

<pallas_src>
import jax
import jax.numpy as jnp
from jax.experimental import pallas as pl
from jax.experimental.pallas import tpu as pltpu
import numpy as np

_LANE = 512  # innermost (lane) width; multiple of 128


def _scale_kernel(w_ref, x_ref, o_ref):
    # w_ref: (1,) f32 scalar in SMEM; x_ref/o_ref: (tile_rows, LANE) VMEM tiles.
    scale = jnp.exp(w_ref[0])  # f32 transcendental on the EUP (free slot)
    o_ref[...] = (x_ref[...].astype(jnp.float32) * scale).astype(o_ref.dtype)


def learned_alpha_forward(x, w, max_tile_rows=1024):
    """Forward pass: x * exp(w), where w is a scalar parameter (shape (1,))."""
    orig_shape = x.shape
    orig_dtype = x.dtype
    total = x.size

    # ---- flatten to a lane-dense 2D slab (rows, LANE), padding as needed ----
    flat = x.reshape(-1)
    padded_len = pl.cdiv(total, _LANE) * _LANE
    if padded_len != total:
        flat = jnp.pad(flat, (0, padded_len - total))
    rows = padded_len // _LANE

    if rows <= max_tile_rows:
        # Single row-tile equal to the full array -> exempt from (8,128) rule.
        tile_rows = rows
    else:
        # Multi-tile path: tile_rows must be a multiple of 8.
        tile_rows = (max_tile_rows // 8) * 8
        rows_padded = pl.cdiv(rows, tile_rows) * tile_rows
        if rows_padded != rows:
            flat = jnp.pad(flat, (0, (rows_padded - rows) * _LANE))
            rows = rows_padded

    x2d = flat.reshape(rows, _LANE)
    grid = (rows // tile_rows,)

    # Scalar parameter in f32 (precision preserved even for bf16 activations).
    w_f32 = jnp.asarray(w, dtype=jnp.float32).reshape(1)

    out2d = pl.pallas_call(
        _scale_kernel,
        out_shape=jax.ShapeDtypeStruct((rows, _LANE), orig_dtype),
        grid=grid,
        in_specs=[
            pl.BlockSpec(memory_space=pltpu.SMEM),                  # w (scalar)
            pl.BlockSpec((tile_rows, _LANE), lambda i: (i, 0)),     # x tile
        ],
        out_specs=pl.BlockSpec((tile_rows, _LANE), lambda i: (i, 0)),
        compiler_params=pltpu.CompilerParams(
            dimension_semantics=("parallel",),  # megacore sharding on v7x
        ),
    )(w_f32, x2d)

    return out2d.reshape(-1)[:total].reshape(orig_shape)


def init_learned_alpha_params(alpha):
    """Deterministic parameter init mirroring the PyTorch __init__."""
    real_alpha = 1.0 / (2.0 * alpha)
    return jnp.log(jnp.array([real_alpha], dtype=jnp.float32))


def get_alpha(w):
    a = jnp.exp(w)
    return 1.0 / (a * 2.0)


if __name__ == "__main__":
    key = jax.random.PRNGKey(0)
    alpha = 0.25  # hyperparameter -> w = log(1/(2*alpha)) = log(2)
    w = init_learned_alpha_params(alpha)

    # Small NCHW input like the PyTorch module would see.
    x = jax.random.normal(key, (2, 4, 16, 16), dtype=jnp.float32)
    out = jax.block_until_ready(learned_alpha_forward(x, w))
    ref = x * jnp.exp(w[0])
    np.testing.assert_allclose(np.asarray(out), np.asarray(ref),
                               rtol=1e-6, atol=1e-6)

    # Slightly larger input to exercise the multi-tile (gridded, pipelined)
    # path with a small tile so the test stays cheap.
    x2 = jax.random.normal(jax.random.PRNGKey(1), (4, 8, 64, 64),
                           dtype=jnp.float32)
    out2 = jax.block_until_ready(
        learned_alpha_forward(x2, w, max_tile_rows=64))
    ref2 = x2 * jnp.exp(w[0])
    np.testing.assert_allclose(np.asarray(out2), np.asarray(ref2),
                               rtol=1e-6, atol=1e-6)

    # Sanity: get_alpha recovers the original alpha.
    np.testing.assert_allclose(float(get_alpha(w)[0]), alpha, rtol=1e-6)

    print("KERNEL_OK")
</pallas_src>

<mosaic_0001>
module attributes {stable_mosaic.version = 11 : i64} {
  func.func @_scale_kernel(%arg0: i32, %arg1: memref<1xf32, #tpu.memory_space<smem>>, %arg2: memref<4x512xf32, #tpu.memory_space<vmem>>, %arg3: memref<4x512xf32, #tpu.memory_space<vmem>>) attributes {dimension_semantics = [#tpu.dimension_semantics<parallel>], iteration_bounds = array<i64: 1>, scalar_prefetch = 0 : i64, scratch_operands = 0 : i64, tpu.core_type = #tpu.core_type<tc>, window_params = [{transform_indices = @transform_0, window_bounds = array<i64: 1>}, {transform_indices = @transform_1, window_bounds = array<i64: 4, 512>}, {transform_indices = @transform_2, window_bounds = array<i64: 4, 512>}]} {
    %c0 = arith.constant 0 : index
    %0 = memref.load %arg1[%c0] : memref<1xf32, #tpu.memory_space<smem>>
    %1 = math.exp %0 : f32
    %c0_0 = arith.constant 0 : index
    %c0_1 = arith.constant 0 : index
    %2 = vector.load %arg2[%c0_0, %c0_1] : memref<4x512xf32, #tpu.memory_space<vmem>>, vector<4x512xf32>
    %3 = vector.broadcast %1 : f32 to vector<4x512xf32>
    %4 = arith.mulf %2, %3 : vector<4x512xf32>
    %c0_2 = arith.constant 0 : index
    %c0_3 = arith.constant 0 : index
    %5 = vector.load %arg3[%c0_2, %c0_3] : memref<4x512xf32, #tpu.memory_space<vmem>>, vector<4x512xf32>
    tpu.vector_store %arg3[%c0_2, %c0_3], %4 {strides = array<i32>} : memref<4x512xf32, #tpu.memory_space<vmem>>, vector<4x512xf32>,
    return
  }
  func.func @transform_0(%arg0: i32) -> i32 {
    %c0_i32 = arith.constant 0 : i32
    %c0_i32_0 = arith.constant 0 : i32
    return %c0_i32 : i32
  }
  func.func @transform_1(%arg0: i32) -> (i32, i32) {
    %c0_i32 = arith.constant 0 : i32
    %c0_i32_0 = arith.constant 0 : i32
    return %arg0, %c0_i32 : i32, i32
  }
  func.func @transform_2(%arg0: i32) -> (i32, i32) {
    %c0_i32 = arith.constant 0 : i32
    %c0_i32_0 = arith.constant 0 : i32
    return %arg0, %c0_i32 : i32, i32
  }
}

</mosaic_0001>

<llo_original>
// kernel: tpu_custom_call.1
$region0: #{tpu_custom_call.1}
  #allocation0 [shape = 'u32[]', space=smem, size = 0x4, offset = 0x4, fixed_abs, tag = 'smem constant byte address 0x4 - core index']
  #allocation1 [shape = 'u32[144,128]{1,0:T(1,128)}', space=vmem, size = 0x12000, scoped, tag = 'internal scratch']
  #allocation2 [shape = 'f32[1]{0:T(128)S(6)}', space=smem, size = 0x200, scoped, tag = 'scoped memory for tpu_custom_call.1']
  %s0 = inlined_call_operand.<no memory space> [shape: f32[1], index: 0, kind: input, shape index: {}]
  %s1 = inlined_call_operand.hbm [shape: f32[4,512], index: 1, kind: input, shape index: {}]
  %s2 = inlined_call_operand.hbm [shape: f32[4,512], index: 2, kind: output, shape index: {}]
  %s3 = sld [smem:[#allocation0]]
  $region22: #{tpu_custom_call.1} parent=0
    _
  %s5 = ssub.s32 1, %s3
  %s6 = scalar_select 0, %s5, %s3
  %7 = sst [smem:[#allocation2]] %s0
  $region1: #{tpu_custom_call.1} parent=0
    #allocation3 [shape = 'u8[8192]{0}', space=vmem, size = 0x2000, scoped, tag = 'input window, operand 1, single buffered']
    #allocation4 [shape = 's32[1]{0}', space=sflag, size = 0x4, scoped, tag = 'scoped memory for tpu_custom_call.1']
    #allocation5 [shape = 's32[1]{0}', space=sflag, size = 0x4, scoped, tag = 'scoped memory for tpu_custom_call.1']
    #allocation6 [shape = 'u8[8192]{0}', space=vmem, size = 0x2000, scoped, tag = 'output window, operand 0, single buffered']
    %8 = vsyncpa [#allocation4], 0
    %9 = vsyncpa [#allocation5], 0
    // Predicated region
    $region2: #{tpu_custom_call.1} parent=1 // pred_check
      _
    $region3: #{tpu_custom_call.1} parent=1 // pred_check_branch
      %11 = sbr.rel (0) target = $region5
    $region4: #{tpu_custom_call.1} parent=1 // pred_region
      _
    $region5: #{tpu_custom_call.1} parent=1 // pred_fallthru
      _
    // Predicated region
    $region6: #{tpu_custom_call.1} parent=1 // pred_check
      _
    $region7: #{tpu_custom_call.1} parent=1 // pred_check_branch
      %13 = sbr.rel (0) target = $region9
    $region8: #{tpu_custom_call.1} parent=1 // pred_region
      %s15 = ssub.s32 256, 256
      %16 = vsyncadd [#allocation4], %s15
      %s18 = sshll.u32 [#allocation3], 4
      %s19 = int_to_ptr.vmem [resolvable:$true] %s18
      %21 = dma.hbm_to_vmem [thread:$0]  %s1, 256, %s19, [#allocation4]
    $region9: #{tpu_custom_call.1} parent=1 // pred_fallthru
      _
    // Predicated region
    $region10: #{tpu_custom_call.1} parent=1 // pred_check
      _
    $region11: #{tpu_custom_call.1} parent=1 // pred_check_branch
      %23 = sbr.rel (0) target = $region13
    $region12: #{tpu_custom_call.1} parent=1 // pred_region
      %24 = dma.done [#allocation4], 256
    $region13: #{tpu_custom_call.1} parent=1 // pred_fallthru
      _
    %s25 = sld [smem:[#allocation2]]
    %v26 = vstv %s25
    %v27 = vmul.f32 %v26, 1.442695
    %v28 = vpow.pop %v27
    %s29 = vtos %v28
    %v30 = vld [vmem:[#allocation3] sm:$0xff]
    %v31 = vld [vmem:[#allocation3 + $0x8] sm:$0xff]
    %v32 = vstv %s29
    %v33 = vmul.f32 %v30, %v32
    %v34 = vmul.f32 %v31, %v32
    %35 = vst [vmem:[#allocation6] sm:$0xff] %v33
    %36 = vst [vmem:[#allocation6 + $0x8] sm:$0xff] %v34
    // Predicated region
    $region14: #{tpu_custom_call.1} parent=1 // pred_check
      _
    $region15: #{tpu_custom_call.1} parent=1 // pred_check_branch
      %38 = sbr.rel (0) target = $region17
    $region16: #{tpu_custom_call.1} parent=1 // pred_region
      %s40 = ssub.s32 256, 256
      %41 = vsyncadd [#allocation5], %s40
      %s43 = sshll.u32 [#allocation6], 4
      %s44 = int_to_ptr.vmem [resolvable:$true] %s43
      %46 = dma.vmem_to_hbm [thread:$0]  %s44, 256, %s2, [#allocation5]
    $region17: #{tpu_custom_call.1} parent=1 // pred_fallthru
      _
    // Predicated region
    $region18: #{tpu_custom_call.1} parent=1 // pred_check
      _
    $region19: #{tpu_custom_call.1} parent=1 // pred_check_branch
      %48 = sbr.rel (0) target = $region21
    $region20: #{tpu_custom_call.1} parent=1 // pred_region
      %49 = dma.done [#allocation5], 256
    $region21: #{tpu_custom_call.1} parent=1 // pred_fallthru
      _
    %50 = vsyncpa [#allocation4], 1
    %51 = vsyncpa [#allocation5], 1

</llo_original>
